<compile_context>
chip_gen: v6e
topology: v6e:2x2x1
jax: 0.10.0
libtpu: 0.0.40
codegen_flags: <defaults>
</compile_context>

<pallas_src>
import math

import jax
import jax.numpy as jnp
from jax.experimental import pallas as pl
from jax.experimental.pallas import tpu as pltpu

_MiB = 1024 * 1024


def _round_up(x: int, m: int) -> int:
    return ((x + m - 1) // m) * m


def _dense_kernel_noacc(x_ref, w_ref, b_ref, o_ref):
    """Single-K-step tile: y = x @ W + b (no scratch accumulator)."""
    o_ref[...] = (
        jnp.dot(x_ref[...], w_ref[...], preferred_element_type=jnp.float32)
        + b_ref[...].astype(jnp.float32)
    ).astype(o_ref.dtype)


def _dense_kernel_acc(x_ref, w_ref, b_ref, o_ref, acc_ref):
    """K-reduction tile with an f32 VMEM accumulator (grid axis 2 = K)."""
    @pl.when(pl.program_id(2) == 0)
    def _init():
        acc_ref[...] = jnp.zeros_like(acc_ref)

    acc_ref[...] += jnp.dot(
        x_ref[...], w_ref[...], preferred_element_type=jnp.float32
    )

    @pl.when(pl.program_id(2) == pl.num_programs(2) - 1)
    def _finalize():
        o_ref[...] = (
            acc_ref[...] + b_ref[...].astype(jnp.float32)
        ).astype(o_ref.dtype)


def perceiver_self_output(
    hidden_states,
    weight,
    bias,
    *,
    compute_dtype=None,
    vmem_limit_bytes: int | None = None,
    force_general: bool = False,
    tm: int | None = None,
    tn: int | None = None,
    tk: int | None = None,
):
    """y = hidden_states @ weight + bias (nn.Linear over the last dim).

    hidden_states: [..., K]
    weight:        [K, N]   (== torch weight.T)
    bias:          [N]
    compute_dtype: optional cast of x/W (e.g. jnp.bfloat16); matmul still
                   accumulates in f32 and the output keeps the input dtype.
    """
    orig_shape = hidden_states.shape
    K = orig_shape[-1]
    Kw, N = weight.shape
    assert Kw == K, "weight first dim must match hidden_states last dim"

    out_dtype = hidden_states.dtype
    if compute_dtype is not None:
        hidden_states = hidden_states.astype(compute_dtype)
        weight = weight.astype(compute_dtype)

    x2d = hidden_states.reshape(-1, K)
    M = x2d.shape[0]
    bias2d = bias.reshape(1, N)

    x_item = jnp.dtype(x2d.dtype).itemsize
    w_item = jnp.dtype(weight.dtype).itemsize
    b_item = jnp.dtype(bias.dtype).itemsize
    o_item = jnp.dtype(out_dtype).itemsize

    # ------------------------------------------------------------- Path A --
    # Weight-resident, single K step, no padding / slicing.
    tm_a = min(M, tm if tm is not None else 1024)
    if tm is None and M >= 512 and pl.cdiv(M, tm_a) < 2:
        # v7x has 2 TensorCores sharded over the "parallel" axis: make sure a
        # reasonably sized problem produces at least two M blocks.
        tm_a = _round_up(pl.cdiv(M, 2), 8)
    footprint_a = (
        2 * Kw * N * w_item          # resident weight (<= 2 buffers)
        + 2 * tm_a * K * x_item      # double-buffered x tiles
        + 2 * tm_a * N * o_item      # double-buffered output tiles
        + 2 * N * b_item
    )

    if (not force_general) and footprint_a <= 28 * _MiB:
        grid_m = pl.cdiv(M, tm_a)
        vmem_limit = (
            vmem_limit_bytes
            if vmem_limit_bytes is not None
            else min(48 * _MiB, max(32 * _MiB, footprint_a + 8 * _MiB))
        )
        cost = pl.CostEstimate(
            flops=2 * M * N * K,
            transcendentals=0,
            bytes_accessed=(
                x_item * M * K + w_item * K * N + b_item * N + o_item * M * N
            ),
        )
        out = pl.pallas_call(
            _dense_kernel_noacc,
            out_shape=jax.ShapeDtypeStruct((M, N), out_dtype),
            grid_spec=pltpu.PrefetchScalarGridSpec(
                num_scalar_prefetch=0,
                grid=(grid_m,),
                in_specs=[
                    pl.BlockSpec((tm_a, K), lambda i: (i, 0)),
                    pl.BlockSpec((K, N), lambda i: (0, 0)),   # resident weight
                    pl.BlockSpec((1, N), lambda i: (0, 0)),   # resident bias
                ],
                out_specs=pl.BlockSpec((tm_a, N), lambda i: (i, 0)),
            ),
            compiler_params=pltpu.CompilerParams(
                dimension_semantics=("parallel",),
                vmem_limit_bytes=vmem_limit,
            ),
            cost_estimate=cost,
        )(x2d, weight, bias2d)
        return out.reshape(*orig_shape[:-1], N)

    # ------------------------------------------------------------- Path B --
    # General tiled matmul (weight too large to keep resident).  Inputs are
    # zero-padded to tile multiples (zeros along K are benign; padded M rows /
    # N cols are sliced off) so every block is exactly aligned.
    tm_b = tm if tm is not None else 1024
    tn_b = tn if tn is not None else 512
    tk_b = tk if tk is not None else 512
    tm_b = min(tm_b, _round_up(M, 8))
    tn_b = min(tn_b, _round_up(N, 128))
    tk_b = min(tk_b, _round_up(K, 128))

    Mp = _round_up(M, tm_b)
    Np = _round_up(N, tn_b)
    Kp = _round_up(K, tk_b)

    x_p = x2d if (Mp == M and Kp == K) else jnp.pad(
        x2d, ((0, Mp - M), (0, Kp - K)))
    w_p = weight if (Kp == K and Np == N) else jnp.pad(
        weight, ((0, Kp - K), (0, Np - N)))
    b_p = (bias if Np == N else jnp.pad(bias, (0, Np - N))).reshape(1, Np)

    grid_m, grid_n, grid_k = Mp // tm_b, Np // tn_b, Kp // tk_b
    single_k = grid_k == 1

    footprint_b = (
        2 * (tm_b * tk_b * x_item + tk_b * tn_b * w_item)
        + 2 * tm_b * tn_b * o_item
        + (0 if single_k else tm_b * tn_b * 4)
        + 2 * tn_b * b_item
    )
    vmem_limit = (
        vmem_limit_bytes
        if vmem_limit_bytes is not None
        else min(48 * _MiB, max(32 * _MiB, footprint_b + 8 * _MiB))
    )

    # Tiled HBM traffic: x is re-read grid_n times, W grid_m times.
    cost = pl.CostEstimate(
        flops=2 * M * N * K,
        transcendentals=0,
        bytes_accessed=(
            x_item * Mp * Kp * grid_n
            + w_item * Kp * Np * grid_m
            + b_item * Np
            + o_item * Mp * Np
        ),
    )

    if single_k:
        out = pl.pallas_call(
            _dense_kernel_noacc,
            out_shape=jax.ShapeDtypeStruct((Mp, Np), out_dtype),
            grid_spec=pltpu.PrefetchScalarGridSpec(
                num_scalar_prefetch=0,
                grid=(grid_m, grid_n),
                in_specs=[
                    pl.BlockSpec((tm_b, tk_b), lambda i, j: (i, 0)),
                    pl.BlockSpec((tk_b, tn_b), lambda i, j: (0, j)),
                    pl.BlockSpec((1, tn_b), lambda i, j: (0, j)),
                ],
                out_specs=pl.BlockSpec((tm_b, tn_b), lambda i, j: (i, j)),
            ),
            compiler_params=pltpu.CompilerParams(
                dimension_semantics=("parallel", "parallel"),
                vmem_limit_bytes=vmem_limit,
            ),
            cost_estimate=cost,
        )(x_p, w_p, b_p)
    else:
        out = pl.pallas_call(
            _dense_kernel_acc,
            out_shape=jax.ShapeDtypeStruct((Mp, Np), out_dtype),
            grid_spec=pltpu.PrefetchScalarGridSpec(
                num_scalar_prefetch=0,
                grid=(grid_m, grid_n, grid_k),
                in_specs=[
                    pl.BlockSpec((tm_b, tk_b), lambda i, j, k: (i, k)),
                    pl.BlockSpec((tk_b, tn_b), lambda i, j, k: (k, j)),
                    pl.BlockSpec((1, tn_b), lambda i, j, k: (0, j)),
                ],
                out_specs=pl.BlockSpec((tm_b, tn_b), lambda i, j, k: (i, j)),
                scratch_shapes=[pltpu.VMEM((tm_b, tn_b), jnp.float32)],
            ),
            compiler_params=pltpu.CompilerParams(
                dimension_semantics=("parallel", "parallel", "arbitrary"),
                vmem_limit_bytes=vmem_limit,
            ),
            cost_estimate=cost,
        )(x_p, w_p, b_p)

    if Mp != M or Np != N:
        out = out[:M, :N]
    return out.reshape(*orig_shape[:-1], N)


if __name__ == "__main__":
    # Small shapes consistent with the module's forward.
    batch, seq = 2, 8
    input_channels, output_channels = 32, 64

    key = jax.random.PRNGKey(0)
    k_x, k_w, k_b = jax.random.split(key, 3)

    hidden_states = jax.random.normal(
        k_x, (batch, seq, input_channels), dtype=jnp.float32
    )
    # nn.Linear(in, out) init bounds; torch weight is [out, in] — kept here
    # transposed as [in, out] so the kernel is a plain row-major matmul.
    bound = 1.0 / math.sqrt(input_channels)
    weight = jax.random.uniform(
        k_w, (input_channels, output_channels),
        minval=-bound, maxval=bound, dtype=jnp.float32,
    )
    bias = jax.random.uniform(
        k_b, (output_channels,), minval=-bound, maxval=bound, dtype=jnp.float32
    )

    # 1) Default (weight-resident fast path).
    y = perceiver_self_output(hidden_states, weight, bias)
    jax.block_until_ready(y)
    y_ref = hidden_states @ weight + bias
    assert y.shape == (batch, seq, output_channels)
    assert jnp.allclose(y, y_ref, atol=1e-5, rtol=1e-5)

    # 2) General tiled path, single-K fast kernel (exercises padding/slicing).
    y2 = perceiver_self_output(hidden_states, weight, bias, force_general=True)
    jax.block_until_ready(y2)
    assert jnp.allclose(y2, y_ref, atol=1e-5, rtol=1e-5)

    # 3) General tiled path with a K-reduction grid axis (f32 accumulator).
    k_x2, k_w2, k_b2 = jax.random.split(jax.random.PRNGKey(0), 3)
    K3, N3 = 384, 256
    x3 = jax.random.normal(k_x2, (batch, seq, K3), dtype=jnp.float32)
    b3d = 1.0 / math.sqrt(K3)
    w3 = jax.random.uniform(k_w2, (K3, N3), minval=-b3d, maxval=b3d,
                            dtype=jnp.float32)
    b3 = jax.random.uniform(k_b2, (N3,), minval=-b3d, maxval=b3d,
                            dtype=jnp.float32)
    y3 = perceiver_self_output(x3, w3, b3, force_general=True, tk=128)
    jax.block_until_ready(y3)
    y3_ref = x3 @ w3 + b3
    assert jnp.allclose(y3, y3_ref, atol=1e-4, rtol=1e-5)

    print("KERNEL_OK")
</pallas_src>

<mosaic_0001>
module attributes {stable_mosaic.version = 11 : i64} {
  func.func @_dense_kernel_noacc(%arg0: i32, %arg1: memref<16x32xf32, #tpu.memory_space<vmem>>, %arg2: memref<32x64xf32, #tpu.memory_space<vmem>>, %arg3: memref<1x64xf32, #tpu.memory_space<vmem>>, %arg4: memref<16x64xf32, #tpu.memory_space<vmem>>) attributes {dimension_semantics = [#tpu.dimension_semantics<parallel>], iteration_bounds = array<i64: 1>, scalar_prefetch = 0 : i64, scratch_operands = 0 : i64, tpu.core_type = #tpu.core_type<tc>, window_params = [{transform_indices = @transform_0, window_bounds = array<i64: 16, 32>}, {pipeline_mode = #tpu.pipeline_mode<synchronous>, transform_indices = @transform_1, window_bounds = array<i64: 32, 64>}, {pipeline_mode = #tpu.pipeline_mode<synchronous>, transform_indices = @transform_2, window_bounds = array<i64: 1, 64>}, {transform_indices = @transform_3, window_bounds = array<i64: 16, 64>}]} {
    %c0 = arith.constant 0 : index
    %c0_0 = arith.constant 0 : index
    %0 = vector.load %arg1[%c0, %c0_0] : memref<16x32xf32, #tpu.memory_space<vmem>>, vector<16x32xf32>
    %c0_1 = arith.constant 0 : index
    %c0_2 = arith.constant 0 : index
    %1 = vector.load %arg2[%c0_1, %c0_2] : memref<32x64xf32, #tpu.memory_space<vmem>>, vector<32x64xf32>
    %cst = arith.constant dense<0.000000e+00> : vector<16x64xf32>
    %2 = tpu.matmul %0, %1, %cst {dimension_numbers = #tpu.dot_dimension_numbers<[1], [0], [0], [1], [0, 0, 1, 1], [], []>} : vector<16x32xf32>, vector<32x64xf32>, vector<16x64xf32> -> vector<16x64xf32>
    %c0_3 = arith.constant 0 : index
    %c0_4 = arith.constant 0 : index
    %3 = vector.load %arg3[%c0_3, %c0_4] : memref<1x64xf32, #tpu.memory_space<vmem>>, vector<1x64xf32>
    %4 = vector.broadcast %3 : vector<1x64xf32> to vector<16x64xf32>
    %5 = arith.addf %2, %4 : vector<16x64xf32>
    %c0_5 = arith.constant 0 : index
    %c0_6 = arith.constant 0 : index
    %6 = vector.load %arg4[%c0_5, %c0_6] : memref<16x64xf32, #tpu.memory_space<vmem>>, vector<16x64xf32>
    tpu.vector_store %arg4[%c0_5, %c0_6], %5 {strides = array<i32>} : memref<16x64xf32, #tpu.memory_space<vmem>>, vector<16x64xf32>,
    return
  }
  func.func @transform_0(%arg0: i32) -> (i32, i32) {
    %c0_i32 = arith.constant 0 : i32
    %c0_i32_0 = arith.constant 0 : i32
    return %arg0, %c0_i32 : i32, i32
  }
  func.func @transform_1(%arg0: i32) -> (i32, i32) {
    %c0_i32 = arith.constant 0 : i32
    %c0_i32_0 = arith.constant 0 : i32
    %c0_i32_1 = arith.constant 0 : i32
    return %c0_i32, %c0_i32_0 : i32, i32
  }
  func.func @transform_2(%arg0: i32) -> (i32, i32) {
    %c0_i32 = arith.constant 0 : i32
    %c0_i32_0 = arith.constant 0 : i32
    %c0_i32_1 = arith.constant 0 : i32
    return %c0_i32, %c0_i32_0 : i32, i32
  }
  func.func @transform_3(%arg0: i32) -> (i32, i32) {
    %c0_i32 = arith.constant 0 : i32
    %c0_i32_0 = arith.constant 0 : i32
    return %arg0, %c0_i32 : i32, i32
  }
}

</mosaic_0001>

<llo_original>
// kernel: tpu_custom_call.1
$region0: #{tpu_custom_call.1}
  #allocation0 [shape = 'u32[]', space=smem, size = 0x4, offset = 0x4, fixed_abs, tag = 'smem constant byte address 0x4 - core index']
  #allocation1 [shape = 'u32[144,128]{1,0:T(1,128)}', space=vmem, size = 0x12000, scoped, tag = 'internal scratch']
  %s0 = inlined_call_operand.hbm [shape: f32[16,32], index: 0, kind: input, shape index: {}]
  %s1 = inlined_call_operand.hbm [shape: f32[32,64], index: 1, kind: input, shape index: {}]
  %s2 = inlined_call_operand.vmem [shape: f32[1,64], index: 2, kind: input, shape index: {}]
  %s3 = inlined_call_operand.hbm [shape: f32[16,64], index: 3, kind: output, shape index: {}]
  %s4 = sld [smem:[#allocation0]]
  $region30: #{tpu_custom_call.1} parent=0
    _
  %s6 = ssub.s32 1, %s4
  %s7 = scalar_select 0, %s6, %s4
  $region1: #{tpu_custom_call.1} parent=0
    #allocation2 [shape = 'u8[8192]{0}', space=vmem, size = 0x2000, scoped, tag = 'input window, operand 0, single buffered']
    #allocation3 [shape = 's32[1]{0}', space=sflag, size = 0x4, scoped, tag = 'scoped memory for tpu_custom_call.1']
    #allocation4 [shape = 's32[1]{0}', space=sflag, size = 0x4, scoped, tag = 'scoped memory for tpu_custom_call.1']
    #allocation5 [shape = 'u8[16384]{0}', space=vmem, size = 0x4000, scoped, tag = 'input window, operand 1, single buffered']
    #allocation6 [shape = 's32[1]{0}', space=sflag, size = 0x4, scoped, tag = 'scoped memory for tpu_custom_call.1']
    #allocation7 [shape = 'u8[8192]{0}', space=vmem, size = 0x2000, scoped, tag = 'output window, operand 0, single buffered']
    %8 = vsyncpa [#allocation3], 0
    %9 = vsyncpa [#allocation6], 0
    %10 = vsyncpa [#allocation4], 0
    // Predicated region
    $region2: #{tpu_custom_call.1} parent=1 // pred_check
      _
    $region3: #{tpu_custom_call.1} parent=1 // pred_check_branch
      %12 = sbr.rel (0) target = $region5
    $region4: #{tpu_custom_call.1} parent=1 // pred_region
      %s14 = ssub.s32 256, 256
      %15 = vsyncadd [#allocation3], %s14
      %s16 = sshll.u32 [#allocation2], 4
      %s17 = int_to_ptr.vmem [resolvable:$true] %s16
      %22 = dma.hbm_to_vmem [thread:$0]  %s0, 256, %s17, [#allocation3], 128, 128, 8
    $region5: #{tpu_custom_call.1} parent=1 // pred_fallthru
      _
    // Predicated region
    $region6: #{tpu_custom_call.1} parent=1 // pred_check
      _
    $region7: #{tpu_custom_call.1} parent=1 // pred_check_branch
      %24 = sbr.rel (0) target = $region9
    $region8: #{tpu_custom_call.1} parent=1 // pred_region
      %s26 = ssub.s32 512, 512
      %27 = vsyncadd [#allocation6], %s26
      %s28 = sshll.u32 [#allocation5], 4
      %s29 = int_to_ptr.vmem [resolvable:$true] %s28
      %34 = dma.hbm_to_vmem [thread:$0]  %s1, 512, %s29, [#allocation6], 128, 128, 8
    $region9: #{tpu_custom_call.1} parent=1 // pred_fallthru
      _
    // Predicated region
    $region10: #{tpu_custom_call.1} parent=1 // pred_check
      _
    $region11: #{tpu_custom_call.1} parent=1 // pred_check_branch
      %36 = sbr.rel (0) target = $region13
    $region12: #{tpu_custom_call.1} parent=1 // pred_region
      _
    $region13: #{tpu_custom_call.1} parent=1 // pred_fallthru
      _
    // Predicated region
    $region14: #{tpu_custom_call.1} parent=1 // pred_check
      _
    $region15: #{tpu_custom_call.1} parent=1 // pred_check_branch
      %38 = sbr.rel (0) target = $region17
    $region16: #{tpu_custom_call.1} parent=1 // pred_region
      %39 = dma.done [#allocation3], 256
    $region17: #{tpu_custom_call.1} parent=1 // pred_fallthru
      _
    // Predicated region
    $region18: #{tpu_custom_call.1} parent=1 // pred_check
      _
    $region19: #{tpu_custom_call.1} parent=1 // pred_check_branch
      %41 = sbr.rel (0) target = $region21
    $region20: #{tpu_custom_call.1} parent=1 // pred_region
      %42 = dma.done [#allocation6], 512
    $region21: #{tpu_custom_call.1} parent=1 // pred_fallthru
      _
    %v43 = vld [vmem:[#allocation2] sm:$0xff]
    %v44 = vld [vmem:[#allocation2 + $0x8] sm:$0xff]
    %v45 = vld [vmem:[#allocation5] sm:$0xff]
    %v46 = vld [vmem:[#allocation5 + $0x8] sm:$0xff]
    %v47 = vld [vmem:[#allocation5 + $0x10] sm:$0xff]
    %v48 = vld [vmem:[#allocation5 + $0x18] sm:$0xff]
    %v49 = vld [vmem:[%s2] sm:$0x1]
    %v51 = vlaneseq
    %v52 = vshrl.u32 %v51, 7
    %v53 = vsub.s32 0, %v52
    %v54 = vrot.slane %v49, %v53
    %vm56 = vcmask 261120
    %v58 = vsel %vm56, %v43, 0
    %v61 = vsel %vm56, %v44, 0
    %63 = vmatprep.subr.mxu0 0.0
    %64 = vmatpush1.msra.mxu0 0.0
    %65 = vmatprep.subr.mxu0 0.0
    %66 = vmatpush1.msra.mxu0 0.0
    %67 = vmatprep.subr.mxu0 0.0
    %68 = vmatpush1.msra.mxu0 0.0
    %69 = vmatprep.subr.mxu0 0.0
    %70 = vmatpush1.msra.mxu0 0.0
    %71 = vmatprep.subr.mxu0 0.0
    %72 = vmatpush1.msra.mxu0 0.0
    %73 = vmatprep.subr.mxu0 0.0
    %74 = vmatpush1.msra.mxu0 0.0
    %75 = vmatprep.subr.mxu0 0.0
    %76 = vmatpush1.msra.mxu0 0.0
    %77 = vmatprep.subr.mxu0 0.0
    %78 = vmatpush1.msra.mxu0 0.0
    %79 = vmatprep.subr.mxu0 0.0
    %80 = vmatpush1.msra.mxu0 0.0
    %81 = vmatprep.subr.mxu0 0.0
    %82 = vmatpush1.msra.mxu0 0.0
    %83 = vmatprep.subr.mxu0 0.0
    %84 = vmatpush1.msra.mxu0 0.0
    %85 = vmatprep.subr.mxu0 0.0
    %86 = vmatpush1.msra.mxu0 0.0
    %87 = vmatprep.subr.mxu0 0.0
    %88 = vmatpush1.msra.mxu0 %v48
    %89 = vmatprep.subr.mxu0 0.0
    %90 = vmatpush1.msra.mxu0 %v47
    %91 = vmatprep.subr.mxu0 0.0
    %92 = vmatpush1.msra.mxu0 %v46
    %93 = vmatprep.subr.mxu0 0.0
    %94 = vmatpush1.msra.mxu0 %v45
    %95 = vmatprep.subr.mxu0 0.0
    %96 = vmatpush2.msra.mxu0 0.0
    %97 = vmatprep.subr.mxu0 0.0
    %98 = vmatpush2.msra.mxu0 0.0
    %99 = vmatprep.subr.mxu0 0.0
    %100 = vmatpush2.msra.mxu0 0.0
    %101 = vmatprep.subr.mxu0 0.0
    %102 = vmatpush2.msra.mxu0 0.0
    %103 = vmatprep.subr.mxu0 0.0
    %104 = vmatpush2.msra.mxu0 0.0
    %105 = vmatprep.subr.mxu0 0.0
    %106 = vmatpush2.msra.mxu0 0.0
    %107 = vmatprep.subr.mxu0 0.0
    %108 = vmatpush2.msra.mxu0 0.0
    %109 = vmatprep.subr.mxu0 0.0
    %110 = vmatpush2.msra.mxu0 0.0
    %111 = vmatprep.subr.mxu0 0.0
    %112 = vmatpush2.msra.mxu0 0.0
    %113 = vmatprep.subr.mxu0 0.0
    %114 = vmatpush2.msra.mxu0 0.0
    %115 = vmatprep.subr.mxu0 0.0
    %116 = vmatpush2.msra.mxu0 0.0
    %117 = vmatprep.subr.mxu0 0.0
    %118 = vmatpush2.msra.mxu0 0.0
    %119 = vmatprep.subr.mxu0 0.0
    %120 = vmatpush2.msra.mxu0 0.0
    %121 = vmatprep.subr.mxu0 0.0
    %122 = vmatpush2.msra.mxu0 0.0
    %123 = vmatprep.subr.mxu0 0.0
    %124 = vmatpush2.msra.mxu0 0.0
    %125 = vmatprep.subr.mxu0 0.0
    %126 = vmatpush2.msra.mxu0 0.0
    %127 = vmatprep.mubr.f32.mxu0 0.0
    %128 = vmatmul.mubr.f32.gmra.mxu0 %v58
    %v129 = vpop.f32.mrf.mxu0
    %v130 = vadd.f32 %v54, %v129
    %v131 = vpop.f32.mrf.mxu0
    %132 = vmatprep.mubr.f32.mxu0 0.0
    %133 = vmatmul.mubr.f32.gmra.mxu0 %v61
    %v134 = vpop.f32.mrf.mxu0
    %v135 = vadd.f32 %v54, %v134
    %v136 = vpop.f32.mrf.mxu0
    %137 = vdwg.mxu0
    %vm138 = vcmask 523264
    %139 = vst.msk [vmem:[#allocation7] sm:$0xff] %vm138, %v130
    %140 = vst.msk [vmem:[#allocation7 + $0x8] sm:$0xff] %vm138, %v135
    // Predicated region
    $region22: #{tpu_custom_call.1} parent=1 // pred_check
      _
    $region23: #{tpu_custom_call.1} parent=1 // pred_check_branch
      %142 = sbr.rel (0) target = $region25
    $region24: #{tpu_custom_call.1} parent=1 // pred_region
      %s144 = ssub.s32 256, 256
      %145 = vsyncadd [#allocation4], %s144
      %s146 = sshll.u32 [#allocation7], 4
      %s147 = int_to_ptr.vmem [resolvable:$true] %s146
      %152 = dma.vmem_to_hbm [thread:$0]  %s147, 256, %s3, [#allocation4], 128, 128, 8
    $region25: #{tpu_custom_call.1} parent=1 // pred_fallthru
      _
    // Predicated region
    $region26: #{tpu_custom_call.1} parent=1 // pred_check
      _
    $region27: #{tpu_custom_call.1} parent=1 // pred_check_branch
      %154 = sbr.rel (0) target = $region29
    $region28: #{tpu_custom_call.1} parent=1 // pred_region
      %155 = dma.done [#allocation4], 256
    $region29: #{tpu_custom_call.1} parent=1 // pred_fallthru
      _
    %156 = vsyncpa [#allocation3], 1
    %157 = vsyncpa [#allocation6], 1
    %158 = vsyncpa [#allocation4], 1

</llo_original>
